<compile_context>
chip_gen: v7x
topology: tpu7x:2x2x1
jax: 0.10.0
libtpu: 0.0.40
codegen_flags: <defaults>
</compile_context>

<pallas_src>
import jax
import jax.numpy as jnp
from jax.experimental import pallas as pl
from jax.experimental.pallas import tpu as pltpu

INPUT_SIZE = 16
HIDDEN_SIZE = 64
OUTPUT_SIZE = 30 + 15 + 15 + 2  # 62
DEFAULT_TILE_B = 2048           # multiple of 256 (MXU height on v6e/v7x), and of 128 (v5e)


def _round_up(n: int, m: int) -> int:
    return ((n + m - 1) // m) * m


def _select_tile_b(B: int, tile_b: int) -> int:
    """Pick the batch tile.

    Tiny batches: tile == 8-aligned padded batch (single grid step).
    Large batches: big tile (multiple of 256, <= tile_b), but small enough
    that the grid has >= 2 steps so v7x's two TensorCores both get work.
    """
    pb8 = _round_up(B, 8)
    if pb8 <= 256:
        return pb8
    half = _round_up(B, 512) // 2          # multiple of 256, >= ceil(B/2)
    return max(256, min(tile_b, half))


def prog_decoder_kernel(x_ref, w1_ref, b1_ref, w2_ref, b2_ref, o_ref):
    # Layer 1: f32 MXU matmul, f32 bias + ReLU on the VPU.
    h = jnp.dot(x_ref[...], w1_ref[...], preferred_element_type=jnp.float32)
    h = jnp.maximum(h + b1_ref[...], 0.0)
    # Layer 2: f32 matmul (h stays in vregs/VMEM, no downcast needed), f32 bias.
    out = jnp.dot(h, w2_ref[...], preferred_element_type=jnp.float32)
    o_ref[...] = (out + b2_ref[...]).astype(o_ref.dtype)


def prog_decoder_forward(x, w1, b1, w2, b2, *, tile_b=DEFAULT_TILE_B):
    """x: [B, IN]; w1: [IN, HID]; b1: [1, HID]; w2: [HID, OUT]; b2: [1, OUT].

    Weights are stored pre-transposed relative to torch.nn.Linear ([in, out]),
    so the kernel computes plain x @ W + b. Returns f32 [B, OUT].
    """
    B, IN = x.shape
    HID = w1.shape[1]
    OUT = w2.shape[1]

    tb = _select_tile_b(B, tile_b)
    padded_b = _round_up(B, tb)

    x_p = x
    if padded_b != B:
        x_p = jnp.pad(x_p, ((0, padded_b - B), (0, 0)))

    grid = (padded_b // tb,)

    # Advisory cost hint for XLA's scheduler (flops/bytes for the real B).
    flops = 2 * B * (IN * HID + HID * OUT)
    bytes_accessed = 4 * (B * (IN + OUT) + IN * HID + HID + HID * OUT + OUT)
    cost = pl.CostEstimate(flops=flops, transcendentals=0,
                           bytes_accessed=bytes_accessed)

    out = pl.pallas_call(
        prog_decoder_kernel,
        out_shape=jax.ShapeDtypeStruct((padded_b, OUT), jnp.float32),
        grid=grid,
        in_specs=[
            # x: tiled over the batch axis.
            pl.BlockSpec((tb, IN), lambda i: (i, 0)),
            # Weights / biases: whole-array blocks, block index constant across
            # the grid -> fetched into VMEM exactly once, stay resident.
            pl.BlockSpec((IN, HID), lambda i: (0, 0)),
            pl.BlockSpec((1, HID), lambda i: (0, 0)),
            pl.BlockSpec((HID, OUT), lambda i: (0, 0)),
            pl.BlockSpec((1, OUT), lambda i: (0, 0)),
        ],
        out_specs=pl.BlockSpec((tb, OUT), lambda i: (i, 0)),
        compiler_params=pltpu.CompilerParams(
            dimension_semantics=("parallel",)),
        cost_estimate=cost,
    )(x_p, w1, b1, w2, b2)

    # Only the batch padding (if any) needs slicing; features are already 62.
    if padded_b != B:
        out = out[:B]
    return out


if __name__ == "__main__":
    BATCH = 8

    key = jax.random.PRNGKey(0)
    kx, k1, k2, k3, k4 = jax.random.split(key, 5)

    # Deterministic synthetic parameters (Linear weights stored as [in, out]).
    x = jax.random.normal(kx, (BATCH, INPUT_SIZE), dtype=jnp.float32)
    w1 = jax.random.normal(k1, (INPUT_SIZE, HIDDEN_SIZE), dtype=jnp.float32) * 0.1
    b1 = jax.random.normal(k2, (1, HIDDEN_SIZE), dtype=jnp.float32) * 0.1
    w2 = jax.random.normal(k3, (HIDDEN_SIZE, OUTPUT_SIZE), dtype=jnp.float32) * 0.1
    b2 = jax.random.normal(k4, (1, OUTPUT_SIZE), dtype=jnp.float32) * 0.1

    out = prog_decoder_forward(x, w1, b1, w2, b2)
    out = jax.block_until_ready(out)
    assert out.shape == (BATCH, OUTPUT_SIZE)

    # Reference: pure f32 PyTorch-equivalent math. With full-f32 kernel math
    # the only divergence is MXU matmul rounding, so the tolerance is tight.
    ref_f32 = jnp.maximum(x @ w1 + b1, 0.0) @ w2 + b2
    assert jnp.allclose(out, ref_f32, atol=2e-2, rtol=2e-2), (
        float(jnp.max(jnp.abs(out - ref_f32))))

    print("KERNEL_OK")
</pallas_src>

<mosaic_0001>
module attributes {stable_mosaic.version = 11 : i64} {
  func.func @prog_decoder_kernel(%arg0: i32, %arg1: memref<8x16xf32, #tpu.memory_space<vmem>>, %arg2: memref<16x64xf32, #tpu.memory_space<vmem>>, %arg3: memref<1x64xf32, #tpu.memory_space<vmem>>, %arg4: memref<64x62xf32, #tpu.memory_space<vmem>>, %arg5: memref<1x62xf32, #tpu.memory_space<vmem>>, %arg6: memref<8x62xf32, #tpu.memory_space<vmem>>) attributes {dimension_semantics = [#tpu.dimension_semantics<parallel>], iteration_bounds = array<i64: 1>, scalar_prefetch = 0 : i64, scratch_operands = 0 : i64, tpu.core_type = #tpu.core_type<tc>, window_params = [{transform_indices = @transform_0, window_bounds = array<i64: 8, 16>}, {pipeline_mode = #tpu.pipeline_mode<synchronous>, transform_indices = @transform_1, window_bounds = array<i64: 16, 64>}, {pipeline_mode = #tpu.pipeline_mode<synchronous>, transform_indices = @transform_2, window_bounds = array<i64: 1, 64>}, {pipeline_mode = #tpu.pipeline_mode<synchronous>, transform_indices = @transform_3, window_bounds = array<i64: 64, 62>}, {pipeline_mode = #tpu.pipeline_mode<synchronous>, transform_indices = @transform_4, window_bounds = array<i64: 1, 62>}, {transform_indices = @transform_5, window_bounds = array<i64: 8, 62>}]} {
    %c0 = arith.constant 0 : index
    %c0_0 = arith.constant 0 : index
    %0 = vector.load %arg1[%c0, %c0_0] : memref<8x16xf32, #tpu.memory_space<vmem>>, vector<8x16xf32>
    %c0_1 = arith.constant 0 : index
    %c0_2 = arith.constant 0 : index
    %1 = vector.load %arg2[%c0_1, %c0_2] : memref<16x64xf32, #tpu.memory_space<vmem>>, vector<16x64xf32>
    %cst = arith.constant dense<0.000000e+00> : vector<8x64xf32>
    %2 = tpu.matmul %0, %1, %cst {dimension_numbers = #tpu.dot_dimension_numbers<[1], [0], [0], [1], [0, 0, 1, 1], [], []>} : vector<8x16xf32>, vector<16x64xf32>, vector<8x64xf32> -> vector<8x64xf32>
    %c0_3 = arith.constant 0 : index
    %c0_4 = arith.constant 0 : index
    %3 = vector.load %arg3[%c0_3, %c0_4] : memref<1x64xf32, #tpu.memory_space<vmem>>, vector<1x64xf32>
    %4 = vector.broadcast %3 : vector<1x64xf32> to vector<8x64xf32>
    %5 = arith.addf %2, %4 : vector<8x64xf32>
    %cst_5 = arith.constant 0.000000e+00 : f32
    %6 = vector.broadcast %cst_5 : f32 to vector<8x64xf32>
    %7 = arith.maximumf %5, %6 : vector<8x64xf32>
    %c0_6 = arith.constant 0 : index
    %c0_7 = arith.constant 0 : index
    %8 = vector.load %arg4[%c0_6, %c0_7] : memref<64x62xf32, #tpu.memory_space<vmem>>, vector<64x62xf32>
    %cst_8 = arith.constant dense<0.000000e+00> : vector<8x62xf32>
    %9 = tpu.matmul %7, %8, %cst_8 {dimension_numbers = #tpu.dot_dimension_numbers<[1], [0], [0], [1], [0, 0, 1, 1], [], []>} : vector<8x64xf32>, vector<64x62xf32>, vector<8x62xf32> -> vector<8x62xf32>
    %c0_9 = arith.constant 0 : index
    %c0_10 = arith.constant 0 : index
    %10 = vector.load %arg5[%c0_9, %c0_10] : memref<1x62xf32, #tpu.memory_space<vmem>>, vector<1x62xf32>
    %11 = vector.broadcast %10 : vector<1x62xf32> to vector<8x62xf32>
    %12 = arith.addf %9, %11 : vector<8x62xf32>
    %c0_11 = arith.constant 0 : index
    %c0_12 = arith.constant 0 : index
    %13 = vector.load %arg6[%c0_11, %c0_12] : memref<8x62xf32, #tpu.memory_space<vmem>>, vector<8x62xf32>
    tpu.vector_store %arg6[%c0_11, %c0_12], %12 {strides = array<i32>} : memref<8x62xf32, #tpu.memory_space<vmem>>, vector<8x62xf32>,
    return
  }
  func.func @transform_0(%arg0: i32) -> (i32, i32) {
    %c0_i32 = arith.constant 0 : i32
    %c0_i32_0 = arith.constant 0 : i32
    return %arg0, %c0_i32 : i32, i32
  }
  func.func @transform_1(%arg0: i32) -> (i32, i32) {
    %c0_i32 = arith.constant 0 : i32
    %c0_i32_0 = arith.constant 0 : i32
    %c0_i32_1 = arith.constant 0 : i32
    return %c0_i32, %c0_i32_0 : i32, i32
  }
  func.func @transform_2(%arg0: i32) -> (i32, i32) {
    %c0_i32 = arith.constant 0 : i32
    %c0_i32_0 = arith.constant 0 : i32
    %c0_i32_1 = arith.constant 0 : i32
    return %c0_i32, %c0_i32_0 : i32, i32
  }
  func.func @transform_3(%arg0: i32) -> (i32, i32) {
    %c0_i32 = arith.constant 0 : i32
    %c0_i32_0 = arith.constant 0 : i32
    %c0_i32_1 = arith.constant 0 : i32
    return %c0_i32, %c0_i32_0 : i32, i32
  }
  func.func @transform_4(%arg0: i32) -> (i32, i32) {
    %c0_i32 = arith.constant 0 : i32
    %c0_i32_0 = arith.constant 0 : i32
    %c0_i32_1 = arith.constant 0 : i32
    return %c0_i32, %c0_i32_0 : i32, i32
  }
  func.func @transform_5(%arg0: i32) -> (i32, i32) {
    %c0_i32 = arith.constant 0 : i32
    %c0_i32_0 = arith.constant 0 : i32
    return %arg0, %c0_i32 : i32, i32
  }
}

</mosaic_0001>

<llo_original>
// kernel: tpu_custom_call.1
$region0: #{tpu_custom_call.1}
  #allocation0 [shape = 'u32[]', space=smem, size = 0x4, offset = 0x4, fixed_abs, tag = 'smem constant byte address 0x4 - core index']
  #allocation1 [shape = 'u32[144,128]{1,0:T(1,128)}', space=vmem, size = 0x12000, scoped, tag = 'internal scratch']
  %s0 = inlined_call_operand.hbm [shape: f32[8,16], index: 0, kind: input, shape index: {}]
  %s1 = inlined_call_operand.hbm [shape: f32[16,64], index: 1, kind: input, shape index: {}]
  %s2 = inlined_call_operand.vmem [shape: f32[1,64], index: 2, kind: input, shape index: {}]
  %s3 = inlined_call_operand.hbm [shape: f32[64,62], index: 3, kind: input, shape index: {}]
  %s4 = inlined_call_operand.vmem [shape: f32[1,62], index: 4, kind: input, shape index: {}]
  %s5 = inlined_call_operand.hbm [shape: f32[8,62], index: 5, kind: output, shape index: {}]
  %s6 = sld [smem:[#allocation0]]
  $region42: #{tpu_custom_call.1} parent=0
    _
  %s8 = ssub.s32 1, %s6
  %s9 = scalar_select 0, %s8, %s6
  $region1: #{tpu_custom_call.1} parent=0
    #allocation2 [shape = 'u8[4096]{0}', space=vmem, size = 0x1000, scoped, tag = 'input window, operand 0, single buffered']
    #allocation3 [shape = 's32[1]{0}', space=sflag, size = 0x4, scoped, tag = 'scoped memory for tpu_custom_call.1']
    #allocation4 [shape = 's32[1]{0}', space=sflag, size = 0x4, scoped, tag = 'scoped memory for tpu_custom_call.1']
    #allocation5 [shape = 'u8[8192]{0}', space=vmem, size = 0x2000, scoped, tag = 'input window, operand 1, single buffered']
    #allocation6 [shape = 's32[1]{0}', space=sflag, size = 0x4, scoped, tag = 'scoped memory for tpu_custom_call.1']
    #allocation7 [shape = 'u8[32768]{0}', space=vmem, size = 0x8000, scoped, tag = 'input window, operand 3, single buffered']
    #allocation8 [shape = 'u8[4096]{0}', space=vmem, size = 0x1000, scoped, tag = 'output window, operand 0, single buffered']
    %10 = vsyncpa [#allocation3], 0
    %11 = vsyncpa [#allocation6], 0
    %12 = vsyncpa [#allocation4], 0
    // Predicated region
    $region2: #{tpu_custom_call.1} parent=1 // pred_check
      _
    $region3: #{tpu_custom_call.1} parent=1 // pred_check_branch
      %14 = sbr.rel (0) target = $region5
    $region4: #{tpu_custom_call.1} parent=1 // pred_region
      %s16 = ssub.s32 128, 128
      %17 = vsyncadd [#allocation3], %s16
      %s19 = sshll.u32 [#allocation2], 4
      %s20 = int_to_ptr.vmem [resolvable:$true] %s19
      %22 = dma.hbm_to_vmem [thread:$0]  %s0, 128, %s20, [#allocation3]
    $region5: #{tpu_custom_call.1} parent=1 // pred_fallthru
      _
    // Predicated region
    $region6: #{tpu_custom_call.1} parent=1 // pred_check
      _
    $region7: #{tpu_custom_call.1} parent=1 // pred_check_branch
      %24 = sbr.rel (0) target = $region9
    $region8: #{tpu_custom_call.1} parent=1 // pred_region
      %s26 = ssub.s32 256, 256
      %27 = vsyncadd [#allocation6], %s26
      %s28 = sshll.u32 [#allocation5], 4
      %s29 = int_to_ptr.vmem [resolvable:$true] %s28
      %34 = dma.hbm_to_vmem [thread:$0]  %s1, 256, %s29, [#allocation6], 128, 128, 8
    $region9: #{tpu_custom_call.1} parent=1 // pred_fallthru
      _
    // Predicated region
    $region10: #{tpu_custom_call.1} parent=1 // pred_check
      _
    $region11: #{tpu_custom_call.1} parent=1 // pred_check_branch
      %36 = sbr.rel (0) target = $region13
    $region12: #{tpu_custom_call.1} parent=1 // pred_region
      _
    $region13: #{tpu_custom_call.1} parent=1 // pred_fallthru
      _
    // Predicated region
    $region14: #{tpu_custom_call.1} parent=1 // pred_check
      _
    $region15: #{tpu_custom_call.1} parent=1 // pred_check_branch
      %38 = sbr.rel (0) target = $region17
    $region16: #{tpu_custom_call.1} parent=1 // pred_region
      %s40 = ssub.s32 1024, 1024
      %41 = vsyncadd [#allocation6], %s40
      %s42 = sshll.u32 [#allocation7], 4
      %s43 = int_to_ptr.vmem [resolvable:$true] %s42
      %48 = dma.hbm_to_vmem [thread:$0]  %s3, 1024, %s43, [#allocation6], 128, 128, 8
    $region17: #{tpu_custom_call.1} parent=1 // pred_fallthru
      _
    // Predicated region
    $region18: #{tpu_custom_call.1} parent=1 // pred_check
      _
    $region19: #{tpu_custom_call.1} parent=1 // pred_check_branch
      %50 = sbr.rel (0) target = $region21
    $region20: #{tpu_custom_call.1} parent=1 // pred_region
      _
    $region21: #{tpu_custom_call.1} parent=1 // pred_fallthru
      _
    // Predicated region
    $region22: #{tpu_custom_call.1} parent=1 // pred_check
      _
    $region23: #{tpu_custom_call.1} parent=1 // pred_check_branch
      %52 = sbr.rel (0) target = $region25
    $region24: #{tpu_custom_call.1} parent=1 // pred_region
      %53 = dma.done [#allocation3], 128
    $region25: #{tpu_custom_call.1} parent=1 // pred_fallthru
      _
    // Predicated region
    $region26: #{tpu_custom_call.1} parent=1 // pred_check
      _
    $region27: #{tpu_custom_call.1} parent=1 // pred_check_branch
      %55 = sbr.rel (0) target = $region29
    $region28: #{tpu_custom_call.1} parent=1 // pred_region
      %56 = dma.done [#allocation6], 256
    $region29: #{tpu_custom_call.1} parent=1 // pred_fallthru
      _
    // Predicated region
    $region30: #{tpu_custom_call.1} parent=1 // pred_check
      _
    $region31: #{tpu_custom_call.1} parent=1 // pred_check_branch
      %58 = sbr.rel (0) target = $region33
    $region32: #{tpu_custom_call.1} parent=1 // pred_region
      %59 = dma.done [#allocation6], 1024
    $region33: #{tpu_custom_call.1} parent=1 // pred_fallthru
      _
    %v60 = vld [vmem:[#allocation2] sm:$0xff]
    %v61 = vld [vmem:[#allocation5] sm:$0xff]
    %v62 = vld [vmem:[#allocation5 + $0x8] sm:$0xff]
    %v63 = vld [vmem:[%s2] sm:$0x1]
    %v65 = vlaneseq
    %v66 = vshrl.u32 %v65, 7
    %v67 = vsub.s32 0, %v66
    %v68 = vrot.slane %v63, %v67
    %vm70 = vcmask 130048
    %v72 = vsel %vm70, %v60, 0
    %74 = vmatprep.subr.mxu0 0.0
    %75 = vmatpush1.msra.mxu0 %v61
    %76 = vmatprep.subr.mxu0 0.0
    %77 = vmatpush1.msra.mxu0 %v62
    %78 = vmatprep.subr.mxu0 0.0
    %79 = vmatpush1.msra.mxu0 0.0
    %80 = vmatprep.subr.mxu0 0.0
    %81 = vmatpush1.msra.mxu0 0.0
    %82 = vmatprep.subr.mxu0 0.0
    %83 = vmatpush1.msra.mxu0 0.0
    %84 = vmatprep.subr.mxu0 0.0
    %85 = vmatpush1.msra.mxu0 0.0
    %86 = vmatprep.subr.mxu0 0.0
    %87 = vmatpush1.msra.mxu0 0.0
    %88 = vmatprep.subr.mxu0 0.0
    %89 = vmatpush1.msra.mxu0 0.0
    %90 = vmatprep.subr.mxu0 0.0
    %91 = vmatpush1.msra.mxu0 0.0
    %92 = vmatprep.subr.mxu0 0.0
    %93 = vmatpush1.msra.mxu0 0.0
    %94 = vmatprep.subr.mxu0 0.0
    %95 = vmatpush1.msra.mxu0 0.0
    %96 = vmatprep.subr.mxu0 0.0
    %97 = vmatpush1.msra.mxu0 0.0
    %98 = vmatprep.subr.mxu0 0.0
    %99 = vmatpush1.msra.mxu0 0.0
    %100 = vmatprep.subr.mxu0 0.0
    %101 = vmatpush1.msra.mxu0 0.0
    %102 = vmatprep.subr.mxu0 0.0
    %103 = vmatpush1.msra.mxu0 0.0
    %104 = vmatprep.subr.mxu0 0.0
    %105 = vmatpush1.msra.mxu0 0.0
    %106 = vmatprep.subr.mxu0 0.0
    %107 = vmatpush1.msra.mxu0 0.0
    %108 = vmatprep.subr.mxu0 0.0
    %109 = vmatpush1.msra.mxu0 0.0
    %110 = vmatprep.subr.mxu0 0.0
    %111 = vmatpush1.msra.mxu0 0.0
    %112 = vmatprep.subr.mxu0 0.0
    %113 = vmatpush1.msra.mxu0 0.0
    %114 = vmatprep.subr.mxu0 0.0
    %115 = vmatpush1.msra.mxu0 0.0
    %116 = vmatprep.subr.mxu0 0.0
    %117 = vmatpush1.msra.mxu0 0.0
    %118 = vmatprep.subr.mxu0 0.0
    %119 = vmatpush1.msra.mxu0 0.0
    %120 = vmatprep.subr.mxu0 0.0
    %121 = vmatpush1.msra.mxu0 0.0
    %122 = vmatprep.subr.mxu0 0.0
    %123 = vmatpush1.msra.mxu0 0.0
    %124 = vmatprep.subr.mxu0 0.0
    %125 = vmatpush1.msra.mxu0 0.0
    %126 = vmatprep.subr.mxu0 0.0
    %127 = vmatpush1.msra.mxu0 0.0
    %128 = vmatprep.subr.mxu0 0.0
    %129 = vmatpush1.msra.mxu0 0.0
    %130 = vmatprep.subr.mxu0 0.0
    %131 = vmatpush1.msra.mxu0 0.0
    %132 = vmatprep.subr.mxu0 0.0
    %133 = vmatpush1.msra.mxu0 0.0
    %134 = vmatprep.subr.mxu0 0.0
    %135 = vmatpush1.msra.mxu0 0.0
    %136 = vmatprep.subr.mxu0 0.0
    %137 = vmatpush1.msra.mxu0 0.0
    %138 = vmatprep.mubr.f32.mxu0 0.0
    %139 = vmatmul.mubr.f32.gmra.mrb[0].mxu0 %v72
    %v140 = vpop.f32.mrb[0].mxu0
    %v141 = vadd.f32 %v68, %v140
    %v142 = vpop.f32.mrb[0].mxu0
    %143 = vdwg.mxu0
    %v144 = vmax.f32 %v141, 0.0
    %v145 = vld [vmem:[#allocation7] sm:$0xff]
    %v146 = vld [vmem:[#allocation7 + $0x8] sm:$0xff]
    %v147 = vld [vmem:[#allocation7 + $0x10] sm:$0xff]
    %v148 = vld [vmem:[#allocation7 + $0x18] sm:$0xff]
    %v149 = vld [vmem:[#allocation7 + $0x20] sm:$0xff]
    %v150 = vld [vmem:[#allocation7 + $0x28] sm:$0xff]
    %v151 = vld [vmem:[#allocation7 + $0x30] sm:$0xff]
    %v152 = vld [vmem:[#allocation7 + $0x38] sm:$0xff]
    %v153 = vld [vmem:[%s4] sm:$0x1]
    %v155 = vlaneseq
    %v156 = vshrl.u32 %v155, 7
    %v157 = vsub.s32 0, %v156
    %v158 = vrot.slane %v153, %v157
    %vm160 = vcmask 523264
    %v162 = vsel %vm160, %v144, 0
    %164 = vmatprep.subr.mxu0 0.0
    %165 = vmatpush1.msra.mxu0 %v145
    %166 = vmatprep.subr.mxu0 0.0
    %167 = vmatpush1.msra.mxu0 %v146
    %168 = vmatprep.subr.mxu0 0.0
    %169 = vmatpush1.msra.mxu0 %v147
    %170 = vmatprep.subr.mxu0 0.0
    %171 = vmatpush1.msra.mxu0 %v148
    %172 = vmatprep.subr.mxu0 0.0
    %173 = vmatpush1.msra.mxu0 %v149
    %174 = vmatprep.subr.mxu0 0.0
    %175 = vmatpush1.msra.mxu0 %v150
    %176 = vmatprep.subr.mxu0 0.0
    %177 = vmatpush1.msra.mxu0 %v151
    %178 = vmatprep.subr.mxu0 0.0
    %179 = vmatpush1.msra.mxu0 %v152
    %180 = vmatprep.subr.mxu0 0.0
    %181 = vmatpush1.msra.mxu0 0.0
    %182 = vmatprep.subr.mxu0 0.0
    %183 = vmatpush1.msra.mxu0 0.0
    %184 = vmatprep.subr.mxu0 0.0
    %185 = vmatpush1.msra.mxu0 0.0
    %186 = vmatprep.subr.mxu0 0.0
    %187 = vmatpush1.msra.mxu0 0.0
    %188 = vmatprep.subr.mxu0 0.0
    %189 = vmatpush1.msra.mxu0 0.0
    %190 = vmatprep.subr.mxu0 0.0
    %191 = vmatpush1.msra.mxu0 0.0
    %192 = vmatprep.subr.mxu0 0.0
    %193 = vmatpush1.msra.mxu0 0.0
    %194 = vmatprep.subr.mxu0 0.0
    %195 = vmatpush1.msra.mxu0 0.0
    %196 = vmatprep.subr.mxu0 0.0
    %197 = vmatpush1.msra.mxu0 0.0
    %198 = vmatprep.subr.mxu0 0.0
    %199 = vmatpush1.msra.mxu0 0.0
    %200 = vmatprep.subr.mxu0 0.0
    %201 = vmatpush1.msra.mxu0 0.0
    %202 = vmatprep.subr.mxu0 0.0
    %203 = vmatpush1.msra.mxu0 0.0
    %204 = vmatprep.subr.mxu0 0.0
    %205 = vmatpush1.msra.mxu0 0.0
    %206 = vmatprep.subr.mxu0 0.0
    %207 = vmatpush1.msra.mxu0 0.0
    %208 = vmatprep.subr.mxu0 0.0
    %209 = vmatpush1.msra.mxu0 0.0
    %210 = vmatprep.subr.mxu0 0.0
    %211 = vmatpush1.msra.mxu0 0.0
    %212 = vmatprep.subr.mxu0 0.0
    %213 = vmatpush1.msra.mxu0 0.0
    %214 = vmatprep.subr.mxu0 0.0
    %215 = vmatpush1.msra.mxu0 0.0
    %216 = vmatprep.subr.mxu0 0.0
    %217 = vmatpush1.msra.mxu0 0.0
    %218 = vmatprep.subr.mxu0 0.0
    %219 = vmatpush1.msra.mxu0 0.0
    %220 = vmatprep.subr.mxu0 0.0
    %221 = vmatpush1.msra.mxu0 0.0
    %222 = vmatprep.subr.mxu0 0.0
    %223 = vmatpush1.msra.mxu0 0.0
    %224 = vmatprep.subr.mxu0 0.0
    %225 = vmatpush1.msra.mxu0 0.0
    %226 = vmatprep.subr.mxu0 0.0
    %227 = vmatpush1.msra.mxu0 0.0
    %228 = vmatprep.mubr.f32.mxu0 0.0
    %229 = vmatmul.mubr.f32.gmra.mrb[0].mxu0 %v162
    %v230 = vpop.f32.mrb[0].mxu0
    %v231 = vadd.f32 %v158, %v230
    %v232 = vpop.f32.mrb[0].mxu0
    %233 = vdwg.mxu0
    %vm234 = vcmask 506880
    %235 = vst.msk [vmem:[#allocation8] sm:$0xff] %vm234, %v231
    // Predicated region
    $region34: #{tpu_custom_call.1} parent=1 // pred_check
      _
    $region35: #{tpu_custom_call.1} parent=1 // pred_check_branch
      %237 = sbr.rel (0) target = $region37
    $region36: #{tpu_custom_call.1} parent=1 // pred_region
      %s239 = ssub.s32 128, 128
      %240 = vsyncadd [#allocation4], %s239
      %s242 = sshll.u32 [#allocation8], 4
      %s243 = int_to_ptr.vmem [resolvable:$true] %s242
      %245 = dma.vmem_to_hbm [thread:$0]  %s243, 128, %s5, [#allocation4]
    $region37: #{tpu_custom_call.1} parent=1 // pred_fallthru
      _
    // Predicated region
    $region38: #{tpu_custom_call.1} parent=1 // pred_check
      _
    $region39: #{tpu_custom_call.1} parent=1 // pred_check_branch
      %247 = sbr.rel (0) target = $region41
    $region40: #{tpu_custom_call.1} parent=1 // pred_region
      %248 = dma.done [#allocation4], 128
    $region41: #{tpu_custom_call.1} parent=1 // pred_fallthru
      _
    %249 = vsyncpa [#allocation3], 1
    %250 = vsyncpa [#allocation6], 1
    %251 = vsyncpa [#allocation4], 1

</llo_original>
